<compile_context>
chip_gen: v5e
topology: v5e:2x2
jax: 0.10.0
libtpu: 0.0.40
codegen_flags: <defaults>
</compile_context>

<pallas_src>
import functools
import math
from typing import NamedTuple

import jax
import jax.numpy as jnp
from jax.experimental import pallas as pl
from jax.experimental.pallas import tpu as pltpu


def _round_up(x, m):
    return (x + m - 1) // m * m


def _vmem_capacity_bytes():
    """Per-TensorCore VMEM capacity; conservative fallback if query fails."""
    try:
        return int(pltpu.get_tpu_info().vmem_capacity_bytes)
    except Exception:
        return 64 << 20  # v7x-sized fallback (safe lower bound)


# --------------------------------------------------------------------------
# Kernels
# --------------------------------------------------------------------------

def _mlp_kernel_single_k(x_ref, w_ref, b_ref, o_ref):
    # Whole K fits in one tile: no accumulator, no pl.when — straight epilogue.
    y = jnp.dot(x_ref[...], w_ref[...], preferred_element_type=jnp.float32)
    y = y + b_ref[...]                     # bias already f32
    o_ref[...] = jnp.maximum(y, 0.0).astype(o_ref.dtype)


def _mlp_kernel_multi_k(x_ref, w_ref, b_ref, o_ref, acc_ref):
    # x_ref: (tm, tk), w_ref: (tk, tn) pre-transposed weight, b_ref: (1, tn)
    # acc_ref: (tm, tn) f32 accumulator carried across the K grid axis.
    k = pl.program_id(2)

    @pl.when(k == 0)
    def _init():
        acc_ref[...] = jnp.zeros_like(acc_ref)

    acc_ref[...] += jnp.dot(x_ref[...], w_ref[...],
                            preferred_element_type=jnp.float32)

    @pl.when(k == pl.num_programs(2) - 1)
    def _finalize():
        y = acc_ref[...] + b_ref[...]
        o_ref[...] = jnp.maximum(y, 0.0).astype(o_ref.dtype)


# --------------------------------------------------------------------------
# One-time parameter preparation (transpose + pad + cast, hoisted out of the
# per-call path).
# --------------------------------------------------------------------------

class MLPParams(NamedTuple):
    w_t: jax.Array          # (Kp, Np) transposed, padded, compute-dtype weight
    b: jax.Array            # (1, Np)  padded f32 bias
    n: int                  # original N (out_features)
    k: int                  # original K (in_features)
    tn: int                 # N tile
    tk: int                 # K tile
    compute_dtype: object   # dtype fed to the MXU


def prepare_mlp_params(weight, bias, *, compute_dtype=None,
                       block_n=512, block_k=None):
    """One-time prep of nn.Linear params for the Pallas kernel.

    weight: [N, K] (PyTorch nn.Linear layout), bias: [N].
    compute_dtype: dtype fed to the MXU.  jnp.bfloat16 is recommended on all
    TPU generations (v5e/v6e/v7x) when ~1e-2 accuracy is acceptable; defaults
    to the weight dtype (exact f32 parity with the PyTorch module).
    """
    N, K = weight.shape
    cdt = jnp.dtype(compute_dtype) if compute_dtype is not None else weight.dtype
    if block_k is None:
        block_k = 2048 if cdt == jnp.bfloat16 else 1024

    tn = min(block_n, _round_up(N, 128))          # lane-dense output tile
    tk = _round_up(K, 128) if K <= block_k else block_k
    Np = _round_up(N, tn)
    Kp = _round_up(K, tk)

    w_t = jnp.transpose(weight)                   # (K, N): standard contraction
    if (Kp - K) or (Np - N):
        w_t = jnp.pad(w_t, ((0, Kp - K), (0, Np - N)))
    w_t = w_t.astype(cdt)

    b = bias.astype(jnp.float32)
    if Np - N:
        b = jnp.pad(b, ((0, Np - N),))
    b = b.reshape(1, Np)

    return MLPParams(w_t=w_t, b=b, n=N, k=K, tn=tn, tk=tk, compute_dtype=cdt)


# --------------------------------------------------------------------------
# Forward
# --------------------------------------------------------------------------

@functools.partial(
    jax.jit, static_argnames=("n_out", "tn", "tk", "block_m", "out_dtype"))
def _mlp_forward_impl(x2, w_t, b2, *, n_out, tn, tk, block_m, out_dtype):
    M, K = x2.shape
    Kp, Np = w_t.shape
    cdt = x2.dtype

    # M tile: multiple of 16 for bf16 (sublane packing), 8 otherwise.
    sub = 16 if cdt == jnp.bfloat16 else 8
    tm = min(block_m, _round_up(M, sub))
    Mp = _round_up(M, tm)
    if (Mp - M) or (Kp - K):
        x2 = jnp.pad(x2, ((0, Mp - M), (0, Kp - K)))

    grid_m, grid_n, grid_k = Mp // tm, Np // tn, Kp // tk

    # Explicit VMEM budget: double-buffered tiles (+ accumulator), capped at
    # 3/4 of this generation's per-TC VMEM (64 MiB v7x, 128 MiB v5e/v6e).
    out_isize = jnp.dtype(out_dtype).itemsize
    tile_bytes = (tm * tk * cdt.itemsize          # x tile
                  + tk * tn * cdt.itemsize        # weight tile
                  + tm * tn * out_isize           # output tile
                  + tn * 4)                       # bias tile
    acc_bytes = tm * tn * 4 if grid_k > 1 else 0
    footprint = 2 * tile_bytes + acc_bytes
    vmem_limit = int(min(max(footprint + (8 << 20), 32 << 20),
                         (_vmem_capacity_bytes() * 3) // 4))

    if grid_k == 1:
        # Fast path: whole K in one block — no accumulator scratch.
        grid = (grid_m, grid_n)
        in_specs = [
            pl.BlockSpec((tm, tk), lambda i, j: (i, 0)),   # x row tile
            pl.BlockSpec((tk, tn), lambda i, j: (0, j)),   # (K,N) weight tile
            pl.BlockSpec((1, tn), lambda i, j: (0, j)),    # bias tile
        ]
        out_spec = pl.BlockSpec((tm, tn), lambda i, j: (i, j))
        scratch = []
        kernel = _mlp_kernel_single_k
        dims = ("parallel", "parallel")
    else:
        grid = (grid_m, grid_n, grid_k)
        in_specs = [
            pl.BlockSpec((tm, tk), lambda i, j, k: (i, k)),
            pl.BlockSpec((tk, tn), lambda i, j, k: (k, j)),
            pl.BlockSpec((1, tn), lambda i, j, k: (0, j)),
        ]
        out_spec = pl.BlockSpec((tm, tn), lambda i, j, k: (i, j))
        scratch = [pltpu.VMEM((tm, tn), jnp.float32)]
        kernel = _mlp_kernel_multi_k
        dims = ("parallel", "parallel", "arbitrary")

    out_padded = pl.pallas_call(
        kernel,
        out_shape=jax.ShapeDtypeStruct((Mp, Np), out_dtype),
        grid_spec=pltpu.PrefetchScalarGridSpec(
            num_scalar_prefetch=0,
            grid=grid,
            in_specs=in_specs,
            out_specs=out_spec,
            scratch_shapes=scratch,
        ),
        compiler_params=pltpu.CompilerParams(
            dimension_semantics=dims,
            vmem_limit_bytes=vmem_limit),
    )(x2, w_t, b2)

    return out_padded[:M, :n_out]


def mlp_forward(x, params: MLPParams, *, block_m=512):
    """relu(x @ weight.T + bias) for x of shape [..., K]; returns [..., N]."""
    *lead, K = x.shape
    assert K == params.k, f"expected last dim {params.k}, got {K}"
    M = math.prod(lead) if lead else 1
    x2 = x.reshape(M, K).astype(params.w_t.dtype)     # only x is cast per call
    out2 = _mlp_forward_impl(
        x2, params.w_t, params.b,
        n_out=params.n, tn=params.tn, tk=params.tk,
        block_m=block_m, out_dtype=x.dtype)
    return out2.reshape(*lead, params.n)


# --------------------------------------------------------------------------
# Demo / correctness check
# --------------------------------------------------------------------------

if __name__ == "__main__":
    key = jax.random.PRNGKey(0)
    kx, kw, kb, k2x, k2w, k2b = jax.random.split(key, 6)

    # ---- Shapes implied by the module's forward: Linear(32 -> 64) + ReLU ----
    in_features, out_features = 32, 64
    batch, seq = 2, 8

    x = jax.random.normal(kx, (batch, seq, in_features), dtype=jnp.float32)
    bound = 1.0 / math.sqrt(in_features)
    weight = jax.random.uniform(kw, (out_features, in_features),
                                minval=-bound, maxval=bound, dtype=jnp.float32)
    bias = jax.random.uniform(kb, (out_features,),
                              minval=-bound, maxval=bound, dtype=jnp.float32)

    ref = jnp.maximum(
        jnp.dot(x, weight.T, precision=jax.lax.Precision.HIGHEST) + bias, 0.0)

    # f32 path (exact parity with the PyTorch module), single-K-step kernel.
    params_f32 = prepare_mlp_params(weight, bias)          # one-time weight prep
    out = mlp_forward(x, params_f32)
    jax.block_until_ready(out)
    assert out.shape == (batch, seq, out_features)
    assert jnp.allclose(out, ref, atol=1e-4, rtol=1e-4)

    # bf16 MXU path (recommended on v5e/v6e/v7x when accuracy allows).
    params_bf16 = prepare_mlp_params(weight, bias, compute_dtype=jnp.bfloat16)
    out_bf16 = mlp_forward(x, params_bf16)
    jax.block_until_ready(out_bf16)
    assert jnp.allclose(out_bf16, ref, atol=5e-2, rtol=5e-2)

    # ---- Secondary check: exercise the multi-K-step accumulator kernel ------
    in2, out2_feat, m2 = 256, 256, 24
    x_big = jax.random.normal(k2x, (m2, in2), dtype=jnp.float32)
    bound2 = 1.0 / math.sqrt(in2)
    w_big = jax.random.uniform(k2w, (out2_feat, in2),
                               minval=-bound2, maxval=bound2, dtype=jnp.float32)
    b_big = jax.random.uniform(k2b, (out2_feat,),
                               minval=-bound2, maxval=bound2, dtype=jnp.float32)
    params_big = prepare_mlp_params(w_big, b_big, block_k=128)   # -> 2 K steps
    y_big = mlp_forward(x_big, params_big)
    jax.block_until_ready(y_big)
    ref_big = jnp.maximum(
        jnp.dot(x_big, w_big.T, precision=jax.lax.Precision.HIGHEST) + b_big, 0.0)
    assert jnp.allclose(y_big, ref_big, atol=2e-3, rtol=2e-3)

    print("KERNEL_OK")
</pallas_src>

<mosaic_0001>
module attributes {stable_mosaic.version = 11 : i64} {
  func.func @_mlp_kernel_single_k(%arg0: i32, %arg1: i32, %arg2: memref<16x128xf32, #tpu.memory_space<vmem>>, %arg3: memref<128x128xf32, #tpu.memory_space<vmem>>, %arg4: memref<1x128xf32, #tpu.memory_space<vmem>>, %arg5: memref<16x128xf32, #tpu.memory_space<vmem>>) attributes {dimension_semantics = [#tpu.dimension_semantics<parallel>, #tpu.dimension_semantics<parallel>], iteration_bounds = array<i64: 1, 1>, scalar_prefetch = 0 : i64, scratch_operands = 0 : i64, tpu.core_type = #tpu.core_type<tc>, window_params = [{transform_indices = @transform_0, window_bounds = array<i64: 16, 128>}, {transform_indices = @transform_1, window_bounds = array<i64: 128, 128>}, {transform_indices = @transform_2, window_bounds = array<i64: 1, 128>}, {transform_indices = @transform_3, window_bounds = array<i64: 16, 128>}]} {
    %c0 = arith.constant 0 : index
    %c0_0 = arith.constant 0 : index
    %0 = vector.load %arg2[%c0, %c0_0] : memref<16x128xf32, #tpu.memory_space<vmem>>, vector<16x128xf32>
    %c0_1 = arith.constant 0 : index
    %c0_2 = arith.constant 0 : index
    %1 = vector.load %arg3[%c0_1, %c0_2] : memref<128x128xf32, #tpu.memory_space<vmem>>, vector<128x128xf32>
    %cst = arith.constant dense<0.000000e+00> : vector<16x128xf32>
    %2 = tpu.matmul %0, %1, %cst {dimension_numbers = #tpu.dot_dimension_numbers<[1], [0], [0], [1], [0, 0, 1, 1], [], []>} : vector<16x128xf32>, vector<128x128xf32>, vector<16x128xf32> -> vector<16x128xf32>
    %c0_3 = arith.constant 0 : index
    %c0_4 = arith.constant 0 : index
    %3 = vector.load %arg4[%c0_3, %c0_4] : memref<1x128xf32, #tpu.memory_space<vmem>>, vector<1x128xf32>
    %4 = vector.broadcast %3 : vector<1x128xf32> to vector<16x128xf32>
    %5 = arith.addf %2, %4 : vector<16x128xf32>
    %cst_5 = arith.constant 0.000000e+00 : f32
    %6 = vector.broadcast %cst_5 : f32 to vector<16x128xf32>
    %7 = arith.maximumf %5, %6 : vector<16x128xf32>
    %c0_6 = arith.constant 0 : index
    %c0_7 = arith.constant 0 : index
    %8 = vector.load %arg5[%c0_6, %c0_7] : memref<16x128xf32, #tpu.memory_space<vmem>>, vector<16x128xf32>
    tpu.vector_store %arg5[%c0_6, %c0_7], %7 {strides = array<i32>} : memref<16x128xf32, #tpu.memory_space<vmem>>, vector<16x128xf32>,
    return
  }
  func.func @transform_0(%arg0: i32, %arg1: i32) -> (i32, i32) {
    %c0_i32 = arith.constant 0 : i32
    %c0_i32_0 = arith.constant 0 : i32
    return %arg0, %c0_i32 : i32, i32
  }
  func.func @transform_1(%arg0: i32, %arg1: i32) -> (i32, i32) {
    %c0_i32 = arith.constant 0 : i32
    %c0_i32_0 = arith.constant 0 : i32
    return %c0_i32, %arg1 : i32, i32
  }
  func.func @transform_2(%arg0: i32, %arg1: i32) -> (i32, i32) {
    %c0_i32 = arith.constant 0 : i32
    %c0_i32_0 = arith.constant 0 : i32
    return %c0_i32, %arg1 : i32, i32
  }
  func.func @transform_3(%arg0: i32, %arg1: i32) -> (i32, i32) {
    %c0_i32 = arith.constant 0 : i32
    return %arg0, %arg1 : i32, i32
  }
}

</mosaic_0001>

<llo_original>
// kernel: _mlp_forward_impl.1
$region0: #{_mlp_forward_impl.1}
  #allocation0 [shape = 'u32[]', space=smem, size = 0x4, offset = 0x4, fixed_abs, tag = 'smem constant byte address 0x4 - core index']
  #allocation1 [shape = 'u32[72,128]{1,0:T(1,128)}', space=vmem, size = 0x9000, scoped, tag = 'internal scratch']
  %s0 = inlined_call_operand.vmem [shape: f32[16,128], index: 0, kind: input, shape index: {}]
  %s1 = inlined_call_operand.hbm [shape: f32[128,128], index: 1, kind: input, shape index: {}]
  %s2 = inlined_call_operand.vmem [shape: f32[1,128], index: 2, kind: input, shape index: {}]
  %s3 = inlined_call_operand.hbm [shape: f32[16,128], index: 3, kind: output, shape index: {}]
  %s4 = sld [smem:[#allocation0]]
  $region26: #{_mlp_forward_impl.1} parent=0
    _
  %s6 = ssub.s32 1, %s4
  %s7 = scalar_select 0, %s6, %s4
  $region1: #{_mlp_forward_impl.1} parent=0
    #allocation2 [shape = 'u8[65536]{0}', space=vmem, size = 0x10000, scoped, tag = 'input window, operand 1, single buffered']
    #allocation3 [shape = 's32[1]{0}', space=sflag, size = 0x4, scoped, tag = 'scoped memory for _mlp_forward_impl.1']
    #allocation4 [shape = 's32[1]{0}', space=sflag, size = 0x4, scoped, tag = 'scoped memory for _mlp_forward_impl.1']
    #allocation5 [shape = 'u8[8192]{0}', space=vmem, size = 0x2000, scoped, tag = 'output window, operand 0, single buffered']
    %8 = vsyncpa [#allocation3], 0
    %9 = vsyncpa [#allocation4], 0
    // Predicated region
    $region2: #{_mlp_forward_impl.1} parent=1 // pred_check
      _
    $region3: #{_mlp_forward_impl.1} parent=1 // pred_check_branch
      %11 = sbr.rel (0) target = $region5
    $region4: #{_mlp_forward_impl.1} parent=1 // pred_region
      _
    $region5: #{_mlp_forward_impl.1} parent=1 // pred_fallthru
      _
    // Predicated region
    $region6: #{_mlp_forward_impl.1} parent=1 // pred_check
      _
    $region7: #{_mlp_forward_impl.1} parent=1 // pred_check_branch
      %13 = sbr.rel (0) target = $region9
    $region8: #{_mlp_forward_impl.1} parent=1 // pred_region
      %15 = vsyncadd [#allocation3], 0
      %s16 = sshll.u32 %s1, 4
      %s17 = int_to_ptr.hbm [resolvable:$true] %s16
      %s18 = sshll.u32 [#allocation2], 4
      %s19 = int_to_ptr.vmem [resolvable:$true] %s18
      %24 = dma.hbm_to_vmem [thread:$0]  %s17, 2048, %s19, [#allocation3], 128, 128, 8
    $region9: #{_mlp_forward_impl.1} parent=1 // pred_fallthru
      _
    // Predicated region
    $region10: #{_mlp_forward_impl.1} parent=1 // pred_check
      _
    $region11: #{_mlp_forward_impl.1} parent=1 // pred_check_branch
      %26 = sbr.rel (0) target = $region13
    $region12: #{_mlp_forward_impl.1} parent=1 // pred_region
      _
    $region13: #{_mlp_forward_impl.1} parent=1 // pred_fallthru
      _
    // Predicated region
    $region14: #{_mlp_forward_impl.1} parent=1 // pred_check
      _
    $region15: #{_mlp_forward_impl.1} parent=1 // pred_check_branch
      %28 = sbr.rel (0) target = $region17
    $region16: #{_mlp_forward_impl.1} parent=1 // pred_region
      %30 = dma.done [#allocation3], 2048
    $region17: #{_mlp_forward_impl.1} parent=1 // pred_fallthru
      _
    %v31 = vld [vmem:[%s0] sm:$0xff]
    %v32 = vld [vmem:[%s0 + $0x8] sm:$0xff]
    %v33 = vld [vmem:[#allocation2] sm:$0xff]
    %v34 = vld [vmem:[#allocation2 + $0x8] sm:$0xff]
    %v35 = vld [vmem:[#allocation2 + $0x10] sm:$0xff]
    %v36 = vld [vmem:[#allocation2 + $0x18] sm:$0xff]
    %v37 = vld [vmem:[#allocation2 + $0x20] sm:$0xff]
    %v38 = vld [vmem:[#allocation2 + $0x28] sm:$0xff]
    %v39 = vld [vmem:[#allocation2 + $0x30] sm:$0xff]
    %v40 = vld [vmem:[#allocation2 + $0x38] sm:$0xff]
    %v41 = vld [vmem:[#allocation2 + $0x40] sm:$0xff]
    %v42 = vld [vmem:[#allocation2 + $0x48] sm:$0xff]
    %v43 = vld [vmem:[#allocation2 + $0x50] sm:$0xff]
    %v44 = vld [vmem:[#allocation2 + $0x58] sm:$0xff]
    %v45 = vld [vmem:[#allocation2 + $0x60] sm:$0xff]
    %v46 = vld [vmem:[#allocation2 + $0x68] sm:$0xff]
    %v47 = vld [vmem:[#allocation2 + $0x70] sm:$0xff]
    %v48 = vld [vmem:[#allocation2 + $0x78] sm:$0xff]
    %v49 = vld [vmem:[%s2] sm:$0x1]
    %v51 = vperm.slane %v49, 0
    %53 = vmatpush.msra.mxu0 %v48
    %54 = vmatpush.msra.mxu0 %v47
    %55 = vmatpush.msra.mxu0 %v46
    %56 = vmatpush.msra.mxu0 %v45
    %57 = vmatpush.msra.mxu0 %v44
    %58 = vmatpush.msra.mxu0 %v43
    %59 = vmatpush.msra.mxu0 %v42
    %60 = vmatpush.msra.mxu0 %v41
    %61 = vmatpush.msra.mxu0 %v40
    %62 = vmatpush.msra.mxu0 %v39
    %63 = vmatpush.msra.mxu0 %v38
    %64 = vmatpush.msra.mxu0 %v37
    %65 = vmatpush.msra.mxu0 %v36
    %66 = vmatpush.msra.mxu0 %v35
    %67 = vmatpush.msra.mxu0 %v34
    %68 = vmatpush.msra.mxu0 %v33
    %69 = vmatmul.f32.gmra.mxu0 %v31
    %v70 = vpop.f32.mrf.mxu0
    %v71 = vadd.f32 %v51, %v70
    %72 = vmatmul.f32.gmra.mxu0 %v32
    %v73 = vpop.f32.mrf.mxu0
    %v74 = vadd.f32 %v51, %v73
    %75 = vdwg.mxu0
    %v76 = vmax.f32 %v71, 0.0
    %v77 = vmax.f32 %v74, 0.0
    %78 = vst [vmem:[#allocation5] sm:$0xff] %v76
    %79 = vst [vmem:[#allocation5 + $0x8] sm:$0xff] %v77
    // Predicated region
    $region18: #{_mlp_forward_impl.1} parent=1 // pred_check
      _
    $region19: #{_mlp_forward_impl.1} parent=1 // pred_check_branch
      %81 = sbr.rel (0) target = $region21
    $region20: #{_mlp_forward_impl.1} parent=1 // pred_region
      %83 = vsyncadd [#allocation4], 0
      %s84 = sshll.u32 [#allocation5], 4
      %s85 = int_to_ptr.vmem [resolvable:$true] %s84
      %s86 = sshll.u32 %s3, 4
      %s87 = int_to_ptr.hbm [resolvable:$true] %s86
      %92 = dma.vmem_to_hbm [thread:$0]  %s85, 256, %s87, [#allocation4], 128, 128, 8
    $region21: #{_mlp_forward_impl.1} parent=1 // pred_fallthru
      _
    // Predicated region
    $region22: #{_mlp_forward_impl.1} parent=1 // pred_check
      _
    $region23: #{_mlp_forward_impl.1} parent=1 // pred_check_branch
      %94 = sbr.rel (0) target = $region25
    $region24: #{_mlp_forward_impl.1} parent=1 // pred_region
      %96 = dma.done [#allocation4], 256
    $region25: #{_mlp_forward_impl.1} parent=1 // pred_fallthru
      _
    %97 = vsyncpa [#allocation3], 1
    %98 = vsyncpa [#allocation4], 1

</llo_original>
